<compile_context>
chip_gen: v7x
topology: tpu7x:2x2x1
jax: 0.10.0
libtpu: 0.0.40
codegen_flags: <defaults>
</compile_context>

<pallas_src>
import functools

import jax
import jax.numpy as jnp
from jax.experimental import pallas as pl
from jax.experimental.pallas import tpu as pltpu


def _round_up(x, m):
    return (x + m - 1) // m * m


def _choose_tm(M, K, E_pad, *, in_bytes, out_bytes, max_tm=8192,
               vmem_budget_bytes=12 << 20, min_grid=2):
    """Pick the M-tile.

    Big tiles amortize per-grid-step pipeline overhead; the VMEM budget keeps
    the double-buffered (input + output) tiles well under every generation's
    scoped default (v5e 16 MiB, v6e/v7x 32 MiB, v7x physical 64 MiB).  When
    there is enough work we keep at least `min_grid` balanced steps so v7x's
    two TensorCores both get a share of the parallel grid axis.  Multiple of
    16 for bf16 sublane packing.
    """
    per_row = 2 * (K * in_bytes + E_pad * out_bytes)     # double-buffered bytes/row
    tm = min(max_tm, max(16, vmem_budget_bytes // per_row))
    if M >= min_grid * 16:
        tm = min(tm, pl.cdiv(M, min_grid))
    tm = max(16, (tm // 16) * 16)
    return tm


# ------------------------------- Pallas kernel -------------------------------

def _patch_embed_kernel(*refs, apply_norm, e_valid, eps):
    """One M-tile: (TM, K) @ (K, E_pad) + bias, optional fused LayerNorm over E."""
    if apply_norm:
        p_ref, w_ref, b_ref, g_ref, bt_ref, o_ref = refs
    else:
        p_ref, w_ref, b_ref, o_ref = refs

    # MXU matmul, bf16 operands, f32 accumulation.
    y = jnp.dot(p_ref[...], w_ref[...], preferred_element_type=jnp.float32)
    y = y + b_ref[0].astype(jnp.float32)

    if apply_norm:
        e_pad = y.shape[-1]
        if e_valid != e_pad:
            # Mask the zero-padded embedding lanes out of the statistics.
            lane = jax.lax.broadcasted_iota(jnp.int32, y.shape, 1)
            ym = jnp.where(lane < e_valid, y, 0.0)
        else:
            ym = y
        # Single pass over the tile: E[x] and E[x^2] together.
        s1 = jnp.sum(ym, axis=-1, keepdims=True)
        s2 = jnp.sum(ym * ym, axis=-1, keepdims=True)
        inv_e = 1.0 / float(e_valid)
        mu = s1 * inv_e
        var = jnp.maximum(s2 * inv_e - mu * mu, 0.0)
        y = (y - mu) * jax.lax.rsqrt(var + eps)          # rsqrt -> EUP slot
        y = y * g_ref[0].astype(jnp.float32) + bt_ref[0].astype(jnp.float32)

    o_ref[...] = y.astype(o_ref.dtype)


# ------------------------------- Pallas wrapper -------------------------------

def patch_embed_pallas(x, conv_w, conv_b, gamma=None, beta=None, *,
                       patch_size, eps=1e-5, compute_dtype=jnp.bfloat16,
                       out_dtype=None, max_tm=8192):
    """x:(B,C,H,W) conv_w:(E,C,ph,pw) conv_b:(E,) -> (B, Ho*Wo, E).

    out_dtype defaults to compute_dtype (bf16) — the output write is the
    dominant HBM stream; pass out_dtype=x.dtype for exact-f32 storage.
    """
    B, C, H, W = x.shape
    ph, pw = patch_size
    assert H % ph == 0 and W % pw == 0, "image size must be divisible by patch size"
    Ho, Wo = H // ph, W // pw
    E = conv_w.shape[0]
    K = C * ph * pw
    E_pad = _round_up(E, 128)            # lane-dense output (unmasked full-lane stores)
    out_dtype = compute_dtype if out_dtype is None else out_dtype

    # Cast BEFORE im2col so the (M,K) reshape/transpose/pad passes move bf16,
    # not f32.  k-order = (c, kh, kw) to match Conv2d weight layout.
    xc = x.astype(compute_dtype)
    p = xc.reshape(B, C, Ho, ph, Wo, pw).transpose(0, 2, 4, 1, 3, 5)
    p = p.reshape(B * Ho * Wo, K)
    M = B * Ho * Wo

    tm = _choose_tm(M, K, E_pad,
                    in_bytes=jnp.dtype(compute_dtype).itemsize,
                    out_bytes=jnp.dtype(out_dtype).itemsize,
                    max_tm=max_tm)
    M_pad = _round_up(M, tm)
    if M_pad != M:
        p = jnp.pad(p, ((0, M_pad - M), (0, 0)))

    # (K, E_pad) projection weight.  K=48 underfills the MXU but the kernel is
    # HBM-bound; zero-padding K would only inflate patch-read traffic.
    wk = conv_w.reshape(E, K).T.astype(compute_dtype)
    b2 = conv_b.reshape(1, E).astype(jnp.float32)
    if E_pad != E:
        wk = jnp.pad(wk, ((0, 0), (0, E_pad - E)))
        b2 = jnp.pad(b2, ((0, 0), (0, E_pad - E)))

    apply_norm = (gamma is not None) or (beta is not None)
    operands = [p, wk, b2]
    in_specs = [
        pl.BlockSpec((tm, K), lambda i: (i, 0)),       # patch rows (tiled M)
        pl.BlockSpec((K, E_pad), lambda i: (0, 0)),    # resident projection weight
        pl.BlockSpec((1, E_pad), lambda i: (0, 0)),    # resident bias
    ]
    if apply_norm:
        g = jnp.ones((E,), jnp.float32) if gamma is None else gamma.astype(jnp.float32)
        bt = jnp.zeros((E,), jnp.float32) if beta is None else beta.astype(jnp.float32)
        g = jnp.pad(g.reshape(1, E), ((0, 0), (0, E_pad - E)))
        bt = jnp.pad(bt.reshape(1, E), ((0, 0), (0, E_pad - E)))
        operands += [g, bt]
        in_specs += [pl.BlockSpec((1, E_pad), lambda i: (0, 0)),
                     pl.BlockSpec((1, E_pad), lambda i: (0, 0))]

    out = pl.pallas_call(
        functools.partial(_patch_embed_kernel, apply_norm=apply_norm,
                          e_valid=E, eps=eps),
        out_shape=jax.ShapeDtypeStruct((M_pad, E_pad), out_dtype),
        grid=(M_pad // tm,),
        in_specs=in_specs,
        out_specs=pl.BlockSpec((tm, E_pad), lambda i: (i, 0)),
        compiler_params=pltpu.CompilerParams(
            dimension_semantics=("parallel",)),
    )(*operands)

    return out[:M, :E].reshape(B, Ho * Wo, E)


# ----------------------------- pure-JAX reference -----------------------------

def patch_embed_ref(x, conv_w, conv_b, gamma=None, beta=None, *, patch_size, eps=1e-5):
    ph, pw = patch_size
    y = jax.lax.conv_general_dilated(
        x, conv_w, window_strides=(ph, pw), padding="VALID",
        dimension_numbers=("NCHW", "OIHW", "NCHW"))
    B, E, Ho, Wo = y.shape
    y = y + conv_b.reshape(1, E, 1, 1)
    y = y.reshape(B, E, Ho * Wo).transpose(0, 2, 1)              # (B, L, E)
    if gamma is not None or beta is not None:
        g = jnp.ones((E,), jnp.float32) if gamma is None else gamma
        bt = jnp.zeros((E,), jnp.float32) if beta is None else beta
        mu = jnp.mean(y, -1, keepdims=True)
        var = jnp.mean(jnp.square(y - mu), -1, keepdims=True)
        y = (y - mu) / jnp.sqrt(var + eps) * g + bt
    return y


# ----------------------------------- Main ------------------------------------

if __name__ == "__main__":
    B, in_chans = 2, 3
    img_size, patch = 32, 4
    embed_dim = 96           # module default; exercises the E->128 lane padding

    key = jax.random.PRNGKey(0)
    kx, kw, kb = jax.random.split(key, 3)
    x = jax.random.normal(kx, (B, in_chans, img_size, img_size), jnp.float32)
    conv_w = 0.02 * jax.random.normal(kw, (embed_dim, in_chans, patch, patch), jnp.float32)
    conv_b = 0.02 * jax.random.normal(kb, (embed_dim,), jnp.float32)
    gamma = jnp.ones((embed_dim,), jnp.float32)
    beta = jnp.zeros((embed_dim,), jnp.float32)

    fwd = jax.jit(functools.partial(patch_embed_pallas, patch_size=(patch, patch)))

    # norm_layer=None (module default)
    out0 = jax.block_until_ready(fwd(x, conv_w, conv_b))
    ref0 = patch_embed_ref(x, conv_w, conv_b, patch_size=(patch, patch))
    # norm_layer=nn.LayerNorm
    out1 = jax.block_until_ready(fwd(x, conv_w, conv_b, gamma, beta))
    ref1 = patch_embed_ref(x, conv_w, conv_b, gamma, beta, patch_size=(patch, patch))

    num_patches = (img_size // patch) ** 2
    assert out0.shape == (B, num_patches, embed_dim), out0.shape
    assert out1.shape == (B, num_patches, embed_dim), out1.shape
    out0f = out0.astype(jnp.float32)
    out1f = out1.astype(jnp.float32)
    assert bool(jnp.all(jnp.isfinite(out0f))) and bool(jnp.all(jnp.isfinite(out1f)))
    # bf16 MXU operands + bf16 output vs f32 reference: loose-but-meaningful tol.
    assert float(jnp.max(jnp.abs(out0f - ref0))) < 5e-2
    assert float(jnp.max(jnp.abs(out1f - ref1))) < 5e-2
    print("KERNEL_OK")
</pallas_src>

<mosaic_0001>
module attributes {stable_mosaic.version = 11 : i64} {
  func.func @_patch_embed_kernel(%arg0: i32, %arg1: memref<64x48xbf16, #tpu.memory_space<vmem>>, %arg2: memref<48x128xbf16, #tpu.memory_space<vmem>>, %arg3: memref<1x128xf32, #tpu.memory_space<vmem>>, %arg4: memref<64x128xbf16, #tpu.memory_space<vmem>>) attributes {dimension_semantics = [#tpu.dimension_semantics<parallel>], iteration_bounds = array<i64: 2>, scalar_prefetch = 0 : i64, scratch_operands = 0 : i64, tpu.core_type = #tpu.core_type<tc>, window_params = [{transform_indices = @transform_0, window_bounds = array<i64: 64, 48>}, {pipeline_mode = #tpu.pipeline_mode<synchronous>, transform_indices = @transform_1, window_bounds = array<i64: 48, 128>}, {pipeline_mode = #tpu.pipeline_mode<synchronous>, transform_indices = @transform_2, window_bounds = array<i64: 1, 128>}, {transform_indices = @transform_3, window_bounds = array<i64: 64, 128>}]} {
    %c0 = arith.constant 0 : index
    %c0_0 = arith.constant 0 : index
    %0 = vector.load %arg1[%c0, %c0_0] : memref<64x48xbf16, #tpu.memory_space<vmem>>, vector<64x48xbf16>
    %c0_1 = arith.constant 0 : index
    %c0_2 = arith.constant 0 : index
    %1 = vector.load %arg2[%c0_1, %c0_2] : memref<48x128xbf16, #tpu.memory_space<vmem>>, vector<48x128xbf16>
    %cst = arith.constant dense<0.000000e+00> : vector<64x128xf32>
    %2 = tpu.matmul %0, %1, %cst {dimension_numbers = #tpu.dot_dimension_numbers<[1], [0], [0], [1], [0, 0, 1, 1], [], []>} : vector<64x48xbf16>, vector<48x128xbf16>, vector<64x128xf32> -> vector<64x128xf32>
    %c0_3 = arith.constant 0 : index
    %c0_4 = arith.constant 0 : index
    %3 = vector.load %arg3[%c0_3, %c0_4] : memref<1x128xf32, #tpu.memory_space<vmem>>, vector<1x128xf32>
    %4 = vector.shape_cast %3 : vector<1x128xf32> to vector<128xf32>
    %5 = vector.shape_cast %4 : vector<128xf32> to vector<1x128xf32>
    %6 = vector.broadcast %5 : vector<1x128xf32> to vector<64x128xf32>
    %7 = arith.addf %2, %6 : vector<64x128xf32>
    %8 = arith.truncf %7 : vector<64x128xf32> to vector<64x128xbf16>
    %c0_5 = arith.constant 0 : index
    %c0_6 = arith.constant 0 : index
    %9 = vector.load %arg4[%c0_5, %c0_6] : memref<64x128xbf16, #tpu.memory_space<vmem>>, vector<64x128xbf16>
    tpu.vector_store %arg4[%c0_5, %c0_6], %8 {strides = array<i32>} : memref<64x128xbf16, #tpu.memory_space<vmem>>, vector<64x128xbf16>,
    return
  }
  func.func @transform_0(%arg0: i32) -> (i32, i32) {
    %c0_i32 = arith.constant 0 : i32
    %c0_i32_0 = arith.constant 0 : i32
    return %arg0, %c0_i32 : i32, i32
  }
  func.func @transform_1(%arg0: i32) -> (i32, i32) {
    %c0_i32 = arith.constant 0 : i32
    %c0_i32_0 = arith.constant 0 : i32
    %c0_i32_1 = arith.constant 0 : i32
    return %c0_i32, %c0_i32_0 : i32, i32
  }
  func.func @transform_2(%arg0: i32) -> (i32, i32) {
    %c0_i32 = arith.constant 0 : i32
    %c0_i32_0 = arith.constant 0 : i32
    %c0_i32_1 = arith.constant 0 : i32
    return %c0_i32, %c0_i32_0 : i32, i32
  }
  func.func @transform_3(%arg0: i32) -> (i32, i32) {
    %c0_i32 = arith.constant 0 : i32
    %c0_i32_0 = arith.constant 0 : i32
    return %arg0, %c0_i32 : i32, i32
  }
}

</mosaic_0001>

<llo_original>
// kernel: patch_embed_pallas.1
$region0: #{patch_embed_pallas.1}
  #allocation0 [shape = 'u32[]', space=smem, size = 0x4, offset = 0x4, fixed_abs, tag = 'smem constant byte address 0x4 - core index']
  #allocation1 [shape = 'u32[144,128]{1,0:T(1,128)}', space=vmem, size = 0x12000, scoped, tag = 'internal scratch']
  %s0 = inlined_call_operand.vmem [shape: bf16[128,48], index: 0, kind: input, shape index: {}]
  %s1 = inlined_call_operand.vmem [shape: bf16[48,128], index: 1, kind: input, shape index: {}]
  %s2 = inlined_call_operand.vmem [shape: f32[1,128], index: 2, kind: input, shape index: {}]
  %s3 = inlined_call_operand.hbm [shape: bf16[128,128], index: 3, kind: output, shape index: {}]
  %s4 = sld [smem:[#allocation0]]
  $region45: #{patch_embed_pallas.1} parent=0
    _
  %s6 = ssub.s32 1, %s4
  %s7 = scalar_select 0, %s6, %s4
  $region1: #{patch_embed_pallas.1} parent=0
    #allocation2 [shape = 'u8[32768]{0}', space=vmem, size = 0x8000, scoped, tag = 'output window, operand 0']
    #allocation3 [shape = 's32[2]{0}', space=sflag, size = 0x8, scoped, tag = 'scoped memory for patch_embed_pallas.1']
    %8 = vsyncpa [#allocation3], 0
    %s9 = scalar_lea.sflag [#allocation3], 1
    %10 = vsyncpa %s9, 0
    loop: start=0, step=1, limit=4
    $region2: #{patch_embed_pallas.1} parent=1 // loop_pre_header
      _
    $region3: #{patch_embed_pallas.1} parent=1 // loop_header
      %s12 = sphi 0, %s16
      %p13 = scmp.ge.s32.totalorder %s12, 4
      %s22 = sphi 0, %s24
      %s25 = sphi 0, %s22
      %s26 = sphi 0, %s25
      %s42 = sphi 0, %s26
      %s46 = sphi 0, %s46
      %s48 = sphi 0, %s46
      %s49 = sphi 0, %s48
      %s63 = sphi 0, %s49
      %s67 = sphi 0, %s67
      %s69 = sphi 0, %s67
      %s70 = sphi 0, %s69
      %s84 = sphi 0, %s70
      %s90 = sphi 0, %s92
      %s93 = sphi 0, %s90
      %s94 = sphi 0, %s93
      %s110 = sphi 0, %s94
    $region4: #{patch_embed_pallas.1} parent=1 // loop_header_branch
      %15 = sbr.rel (%p13) target = $region8
    $region5: #{patch_embed_pallas.1} parent=1 // loop_body
      %s17 = ssub.s32 %s12, 1
      %s18 = ssub.s32 %s12, 2
      %s19 = sadd.s32 %s12, 1
      %s20 = ssub.s32 %s12, %s19
      %p21 = scmp.eq.s32.totalorder %s20, 0
      %s23 = sadd.s32 %s22, 1
      %s24 = scalar_select %p21, %s22, %s23
      %p27 = pneg %p21
      %p28 = scmp.eq.s32.totalorder %s12, 1
      %p29 = por %p27, %p28
      %p30 = scmp.ne.s32.totalorder %s22, %s25
      %p31 = scmp.eq.s32.totalorder %s12, 0
      %p32 = por %p30, %p31
      %p33 = scmp.ne.s32.totalorder %s22, %s25
      %p34 = scmp.eq.s32.totalorder %s17, 1
      %p35 = por %p33, %p34
      %p36 = scmp.ne.s32.totalorder %s25, %s26
      %p37 = scmp.eq.s32.totalorder %s17, 0
      %p38 = por %p36, %p37
      %p39 = scmp.ne.s32.totalorder %s25, %s26
      %p40 = scmp.eq.s32.totalorder %s18, 1
      %p41 = por %p39, %p40
      %p43 = scmp.ne.s32.totalorder %s26, %s42
      %p44 = scmp.eq.s32.totalorder %s18, 0
      %p45 = por %p43, %p44
      %s47 = sadd.s32 %s46, 1
      %p50 = scmp.eq.s32.totalorder %s12, 1
      %p51 = scmp.ne.s32.totalorder %s46, %s48
      %p52 = scmp.eq.s32.totalorder %s12, 0
      %p53 = por %p51, %p52
      %p54 = scmp.ne.s32.totalorder %s46, %s48
      %p55 = scmp.eq.s32.totalorder %s17, 1
      %p56 = por %p54, %p55
      %p57 = scmp.ne.s32.totalorder %s48, %s49
      %p58 = scmp.eq.s32.totalorder %s17, 0
      %p59 = por %p57, %p58
      %p60 = scmp.ne.s32.totalorder %s48, %s49
      %p61 = scmp.eq.s32.totalorder %s18, 1
      %p62 = por %p60, %p61
      %p64 = scmp.ne.s32.totalorder %s49, %s63
      %p65 = scmp.eq.s32.totalorder %s18, 0
      %p66 = por %p64, %p65
      %s68 = sadd.s32 %s67, 1
      %p71 = scmp.eq.s32.totalorder %s12, 1
      %p72 = scmp.ne.s32.totalorder %s67, %s69
      %p73 = scmp.eq.s32.totalorder %s12, 0
      %p74 = por %p72, %p73
      %p75 = scmp.ne.s32.totalorder %s67, %s69
      %p76 = scmp.eq.s32.totalorder %s17, 1
      %p77 = por %p75, %p76
      %p78 = scmp.ne.s32.totalorder %s69, %s70
      %p79 = scmp.eq.s32.totalorder %s17, 0
      %p80 = por %p78, %p79
      %p81 = scmp.ne.s32.totalorder %s69, %s70
      %p82 = scmp.eq.s32.totalorder %s18, 1
      %p83 = por %p81, %p82
      %p85 = scmp.ne.s32.totalorder %s70, %s84
      %p86 = scmp.eq.s32.totalorder %s18, 0
      %p87 = por %p85, %p86
      %s88 = ssub.s32 %s12, %s19
      %p89 = scmp.eq.s32.totalorder %s88, 0
      %s91 = sadd.s32 %s90, 1
      %s92 = scalar_select %p89, %s90, %s91
      %p95 = pneg %p89
      %p96 = scmp.eq.s32.totalorder %s12, 1
      %p97 = por %p95, %p96
      %p98 = scmp.ne.s32.totalorder %s90, %s93
      %p99 = scmp.eq.s32.totalorder %s12, 0
      %p100 = por %p98, %p99
      %p101 = scmp.ne.s32.totalorder %s90, %s93
      %p102 = scmp.eq.s32.totalorder %s17, 1
      %p103 = por %p101, %p102
      %p104 = scmp.ne.s32.totalorder %s93, %s94
      %p105 = scmp.eq.s32.totalorder %s17, 0
      %p106 = por %p104, %p105
      %p107 = scmp.ne.s32.totalorder %s93, %s94
      %p108 = scmp.eq.s32.totalorder %s18, 1
      %p109 = por %p107, %p108
      %p111 = scmp.ne.s32.totalorder %s94, %s110
      %p112 = scmp.eq.s32.totalorder %s18, 0
      %p113 = por %p111, %p112
      %p114 = scmp.le.s32.totalorder 1, %s12
      %p115 = scmp.lt.s32.totalorder %s12, 3
      %p116 = pnand %p114, %p115
      %p117 = pneg %p116
      // Predicated region
      $region9: #{patch_embed_pallas.1} parent=5 // pred_check
        _
      $region10: #{patch_embed_pallas.1} parent=5 // pred_check_branch
        %119 = sbr.rel (%p116) target = $region12
      $region11: #{patch_embed_pallas.1} parent=5 // pred_region
        %s120 = ssub.s32 %s12, 1
        // Predicated region
        $region13: #{patch_embed_pallas.1} parent=11 // pred_check
          %p121 = pneg %p59
        $region14: #{patch_embed_pallas.1} parent=11 // pred_check_branch
          %123 = sbr.rel (%p121) target = $region16
        $region15: #{patch_embed_pallas.1} parent=11 // pred_region
          _
        $region16: #{patch_embed_pallas.1} parent=11 // pred_fallthru
          _
        // Predicated region
        $region17: #{patch_embed_pallas.1} parent=11 // pred_check
          %p124 = pneg %p80
        $region18: #{patch_embed_pallas.1} parent=11 // pred_check_branch
          %126 = sbr.rel (%p124) target = $region20
        $region19: #{patch_embed_pallas.1} parent=11 // pred_region
          _
        $region20: #{patch_embed_pallas.1} parent=11 // pred_fallthru
          _
      $region12: #{patch_embed_pallas.1} parent=5 // pred_fallthru
        _
      %p127 = scmp.lt.s32.totalorder %s12, 2
      // Predicated region
      $region21: #{patch_embed_pallas.1} parent=5 // pred_check
        %p128 = pneg %p127
      $region22: #{patch_embed_pallas.1} parent=5 // pred_check_branch
        %130 = sbr.rel (%p128) target = $region24
      $region23: #{patch_embed_pallas.1} parent=5 // pred_region
        // Predicated region
        $region25: #{patch_embed_pallas.1} parent=23 // pred_check
          %p131 = pneg %p32
        $region26: #{patch_embed_pallas.1} parent=23 // pred_check_branch
          %133 = sbr.rel (%p131) target = $region28
        $region27: #{patch_embed_pallas.1} parent=23 // pred_region
          %s134 = smul.u32 8, %s12
          %p135 = scmp.lt.s32.totalorder %s134, 15
          %s136 = scalar_select %p135, %s134, 15
          %s137 = smul.addr %s136, 4
          %s138 = scalar_lea.vmem %s0, %s137
          %s139 = smul.u32 8, %s12
        $region28: #{patch_embed_pallas.1} parent=23 // pred_fallthru
          _
      $region24: #{patch_embed_pallas.1} parent=5 // pred_fallthru
        _
      %p140 = scmp.le.s32.totalorder 1, %s12
      %p141 = scmp.lt.s32.totalorder %s12, 3
      %p142 = pnand %p140, %p141
      %p143 = pneg %p142
      // Predicated region
      $region29: #{patch_embed_pallas.1} parent=5 // pred_check
        _
      $region30: #{patch_embed_pallas.1} parent=5 // pred_check_branch
        %145 = sbr.rel (%p142) target = $region32
      $region31: #{patch_embed_pallas.1} parent=5 // pred_region
        %s146 = ssub.s32 %s12, 1
        %s147 = smul.u32 8, %s17
        %p148 = scmp.lt.s32.totalorder %s147, 15
        %s149 = scalar_select %p148, %s147, 15
        %s150 = smul.addr %s149, 4
        %s151 = scalar_lea.vmem %s0, %s150
        %p152 = pneg %p38
        %p153 = pneg %p35
        %p154 = pneg %p59
        %p155 = pneg %p56
        %p156 = pneg %p80
        %p157 = pneg %p77
        %p158 = pneg %p106
        %p159 = pneg %p103
        %s160 = sand.u32 %s93, 1
        %s161 = scalar_lea.sflag [#allocation3], %s160
        %s162 = sand.u32 %s93, 1
        %s163 = smul.addr %s162, 32
        %s164 = scalar_lea.vmem [#allocation2], %s163
        %s165 = smul.u32 8, %s17
        %p166 = scmp.lt.s32.totalorder %s165, 15
        %s167 = scalar_select %p166, %s165, 15
        %s168 = smul.addr %s167, 4
        %s169 = scalar_lea.vmem %s0, %s168
        %s170 = smul.u32 8, %s17
        %s171 = smul.u32 8, %s17
        %v173 = vld [vmem:[%s169] sm:$0xf]
        %v174 = vld [vmem:[%s169 + $0x4] sm:$0xf]
        %v175 = vld [vmem:[%s169 + $0x8] sm:$0xf]
        %v176 = vld [vmem:[%s169 + $0xc] sm:$0xf]
        %v177 = vld [vmem:[%s169 + $0x10] sm:$0xf]
        %v178 = vld [vmem:[%s169 + $0x14] sm:$0xf]
        %v179 = vld [vmem:[%s169 + $0x18] sm:$0xf]
        %v180 = vld [vmem:[%s169 + $0x1c] sm:$0xf]
        %v181 = vld [vmem:[%s1] sm:$0xf]
        %v182 = vld [vmem:[%s1 + $0x4] sm:$0xf]
        %v183 = vld [vmem:[%s1 + $0x8] sm:$0xf]
        %v184 = vld [vmem:[%s1 + $0xc] sm:$0xf]
        %v185 = vld [vmem:[%s1 + $0x10] sm:$0xf]
        %v186 = vld [vmem:[%s1 + $0x14] sm:$0xf]
        %v187 = vld [vmem:[%s2] sm:$0x1]
        %v189 = vlaneseq
        %v190 = vshrl.u32 %v189, 7
        %v191 = vsub.s32 0, %v190
        %v192 = vrot.slane %v187, %v191
        %v202 = vunpack.c.l.b16 %v173
        %v203 = vunpack.c.l.b16 %v174
        %v204 = vunpack.c.l.b16 %v175
        %v205 = vunpack.c.l.b16 %v176
        %v206 = vunpack.c.l.b16 %v177
        %v207 = vunpack.c.l.b16 %v178
        %v208 = vunpack.c.l.b16 %v179
        %v209 = vunpack.c.l.b16 %v180
        %v210 = vpack.c.b16 %v203, %v202
        %v211 = vpack.c.b16 %v205, %v204
        %v212 = vpack.c.b16 %v207, %v206
        %v213 = vpack.c.b16 %v209, %v208
        %v220 = vunpack.c.l.b16 %v181
        %v221 = vunpack.c.l.b16 %v182
        %v222 = vunpack.c.l.b16 %v183
        %v223 = vunpack.c.l.b16 %v184
        %v224 = vunpack.c.l.b16 %v185
        %v225 = vunpack.c.l.b16 %v186
        %v226 = vpack.c.b16 %v221, %v220
        %v227 = vpack.c.b16 %v223, %v222
        %v228 = vpack.c.b16 %v225, %v224
        %vm232 = vcmask 392192
        %v234 = vsel %vm232, %v210, 0
        %v237 = vsel %vm232, %v211, 0
        %v240 = vsel %vm232, %v212, 0
        %v243 = vsel %vm232, %v213, 0
        %245 = vmatprep.subr.bf16.mxu0 0
        %246 = vmatpush1.bf16.msra.mxu0 %v226
        %247 = vmatprep.subr.bf16.mxu0 0
        %248 = vmatpush1.bf16.msra.mxu0 %v227
        %249 = vmatprep.subr.bf16.mxu0 0
        %250 = vmatpush1.bf16.msra.mxu0 %v228
        %251 = vmatprep.subr.bf16.mxu0 0
        %252 = vmatpush1.bf16.msra.mxu0 0
        %253 = vmatprep.subr.bf16.mxu0 0
        %254 = vmatpush1.bf16.msra.mxu0 0
        %255 = vmatprep.subr.bf16.mxu0 0
        %256 = vmatpush1.bf16.msra.mxu0 0
        %257 = vmatprep.subr.bf16.mxu0 0
        %258 = vmatpush1.bf16.msra.mxu0 0
        %259 = vmatprep.subr.bf16.mxu0 0
        %260 = vmatpush1.bf16.msra.mxu0 0
        %261 = vmatprep.subr.bf16.mxu0 0
        %262 = vmatpush1.bf16.msra.mxu0 0
        %263 = vmatprep.subr.bf16.mxu0 0
        %264 = vmatpush1.bf16.msra.mxu0 0
        %265 = vmatprep.subr.bf16.mxu0 0
        %266 = vmatpush1.bf16.msra.mxu0 0
        %267 = vmatprep.subr.bf16.mxu0 0
        %268 = vmatpush1.bf16.msra.mxu0 0
        %269 = vmatprep.subr.bf16.mxu0 0
        %270 = vmatpush1.bf16.msra.mxu0 0
        %271 = vmatprep.subr.bf16.mxu0 0
        %272 = vmatpush1.bf16.msra.mxu0 0
        %273 = vmatprep.subr.bf16.mxu0 0
        %274 = vmatpush1.bf16.msra.mxu0 0
        %275 = vmatprep.subr.bf16.mxu0 0
        %276 = vmatpush1.bf16.msra.mxu0 0
        %277 = vmatprep.mubr.bf16.mxu0 0
        %278 = vmatmul.mubr.bf16.gmra.mrb[0].mxu0 %v234
        %v279 = vpop.f32.mrb[0].mxu0
        %v280 = vadd.f32 %v192, %v279
        %v281 = vpop.f32.mrb[0].mxu0
        %v282 = vpop.f32.mrb[0].mxu0
        %v283 = vadd.f32 %v192, %v282
        %v284 = vpop.f32.mrb[0].mxu0
        %285 = vmatprep.mubr.bf16.mxu0 0
        %286 = vmatmul.mubr.bf16.gmra.mrb[0].mxu0 %v237
        %v287 = vpop.f32.mrb[0].mxu0
        %v288 = vadd.f32 %v192, %v287
        %v289 = vpop.f32.mrb[0].mxu0
        %v290 = vpop.f32.mrb[0].mxu0
        %v291 = vadd.f32 %v192, %v290
        %v292 = vpop.f32.mrb[0].mxu0
        %293 = vmatprep.mubr.bf16.mxu0 0
        %294 = vmatmul.mubr.bf16.gmra.mrb[0].mxu0 %v240
        %v295 = vpop.f32.mrb[0].mxu0
        %v296 = vadd.f32 %v192, %v295
        %v297 = vpop.f32.mrb[0].mxu0
        %v298 = vpop.f32.mrb[0].mxu0
        %v299 = vadd.f32 %v192, %v298
        %v300 = vpop.f32.mrb[0].mxu0
        %301 = vmatprep.mubr.bf16.mxu0 0
        %302 = vmatmul.mubr.bf16.gmra.mrb[0].mxu0 %v243
        %v303 = vpop.f32.mrb[0].mxu0
        %v304 = vadd.f32 %v192, %v303
        %v305 = vpop.f32.mrb[0].mxu0
        %v306 = vpop.f32.mrb[0].mxu0
        %v307 = vadd.f32 %v192, %v306
        %v308 = vpop.f32.mrb[0].mxu0
        %309 = vdwg.mxu0
        %v310 = vpack.c.bf16 %v283, %v280
        %v311 = vpack.c.bf16 %v291, %v288
        %v312 = vpack.c.bf16 %v299, %v296
        %v313 = vpack.c.bf16 %v307, %v304
        %v318 = vunpack.c.l.b16 %v310
        %v319 = vunpack.c.h.b16 %v310
        %v320 = vunpack.c.l.b16 %v311
        %v321 = vunpack.c.h.b16 %v311
        %v322 = vunpack.c.l.b16 %v312
        %v323 = vunpack.c.h.b16 %v312
        %v324 = vunpack.c.l.b16 %v313
        %v325 = vunpack.c.h.b16 %v313
        %v326 = vpack.c.b16 %v318, %v318
        %v327 = vpack.c.b16 %v319, %v319
        %v328 = vpack.c.b16 %v320, %v320
        %v329 = vpack.c.b16 %v321, %v321
        %v330 = vpack.c.b16 %v322, %v322
        %v331 = vpack.c.b16 %v323, %v323
        %v332 = vpack.c.b16 %v324, %v324
        %v333 = vpack.c.b16 %v325, %v325
        %342 = vst [vmem:[%s164] sm:$0xf] %v326
        %343 = vst [vmem:[%s164 + $0x4] sm:$0xf] %v327
        %344 = vst [vmem:[%s164 + $0x8] sm:$0xf] %v328
        %345 = vst [vmem:[%s164 + $0xc] sm:$0xf] %v329
        %346 = vst [vmem:[%s164 + $0x10] sm:$0xf] %v330
        %347 = vst [vmem:[%s164 + $0x14] sm:$0xf] %v331
        %348 = vst [vmem:[%s164 + $0x18] sm:$0xf] %v332
        %349 = vst [vmem:[%s164 + $0x1c] sm:$0xf] %v333
        %s350 = sand.u32 %s93, 1
        %s351 = scalar_lea.sflag [#allocation3], %s350
        %s352 = sand.u32 %s93, 1
        %s353 = smul.addr %s352, 32
        %s354 = scalar_lea.vmem [#allocation2], %s353
        // Predicated region
        $region33: #{patch_embed_pallas.1} parent=31 // pred_check
          %p355 = pneg %p103
        $region34: #{patch_embed_pallas.1} parent=31 // pred_check_branch
          %357 = sbr.rel (%p355) target = $region36
        $region35: #{patch_embed_pallas.1} parent=31 // pred_region
          %s358 = smul.u32 8, %s17
          %s360 = ssub.s32 512, 512
          %361 = vsyncadd %s351, %s360
          %s362 = smul.addr %s358, 64
          %s363 = scalar_lea.hbm %s3, %s362
          %s364 = sshll.u32 %s354, 4
          %s365 = int_to_ptr.vmem [resolvable:$true] %s364
          %370 = dma.vmem_to_hbm [thread:$0]  %s365, 512, %s363, %s351, 64, 64, 4
        $region36: #{patch_embed_pallas.1} parent=31 // pred_fallthru
          _
      $region32: #{patch_embed_pallas.1} parent=5 // pred_fallthru
        _
      %p371 = scmp.le.s32.totalorder 2, %s12
      // Predicated region
      $region37: #{patch_embed_pallas.1} parent=5 // pred_check
        %p372 = pneg %p371
      $region38: #{patch_embed_pallas.1} parent=5 // pred_check_branch
        %374 = sbr.rel (%p372) target = $region40
      $region39: #{patch_embed_pallas.1} parent=5 // pred_region
        %s375 = ssub.s32 %s12, 2
        // Predicated region
        $region41: #{patch_embed_pallas.1} parent=39 // pred_check
          %p376 = pneg %p109
        $region42: #{patch_embed_pallas.1} parent=39 // pred_check_branch
          %378 = sbr.rel (%p376) target = $region44
        $region43: #{patch_embed_pallas.1} parent=39 // pred_region
          %s379 = sand.u32 %s94, 1
          %s380 = scalar_lea.sflag [#allocation3], %s379
          %s381 = sand.u32 %s94, 1
          %s382 = smul.addr %s381, 32
          %s383 = scalar_lea.vmem [#allocation2], %s382
          %384 = dma.done %s380, 512
        $region44: #{patch_embed_pallas.1} parent=39 // pred_fallthru
          _
      $region40: #{patch_embed_pallas.1} parent=5 // pred_fallthru
        _
    $region6: #{patch_embed_pallas.1} parent=1 // loop_footer
      %s16 = sadd.s32 1, %s12
    $region7: #{patch_embed_pallas.1} parent=1 // loop_footer_branch
      %11 = sbr.rel target = $region3
    $region8: #{patch_embed_pallas.1} parent=1 // loop_exit
      _
    %385 = vsyncpa [#allocation3], 1
    %s386 = scalar_lea.sflag [#allocation3], 1
    %387 = vsyncpa %s386, 1

</llo_original>
